<compile_context>
chip_gen: v5e
topology: v5e:2x2
jax: 0.10.0
libtpu: 0.0.40
codegen_flags: <defaults>
</compile_context>

<pallas_src>
import jax
import jax.numpy as jnp
from jax.experimental import pallas as pl
from jax.experimental.pallas import tpu as pltpu


def _pick_tile_rows(num_rows, lane_width, itemsize, target_bytes=4 << 20):
    """Pick a row-tile size: a multiple of the dtype's sublane tile whose
    (tile_rows, lane_width) block is ~target_bytes, preferring >=4 grid steps
    when there is enough work (2 steps per v7x TensorCore keeps both cores'
    double buffers busy).  Small row counts use one full-dim block (legal)."""
    m = 32 if itemsize == 1 else 16          # covers f32(8) / bf16(16) / int8(32)
    if num_rows <= m:
        return num_rows                       # full second-minor dim: always legal
    bytes_per_row = max(1, lane_width * itemsize)
    tile = max(m, (int(target_bytes) // bytes_per_row) // m * m)
    if num_rows >= 4 * m:                     # prefer >= 4 grid steps
        tile = min(tile, max(m, (num_rows // 4) // m * m))
    tile = min(tile, (num_rows // m) * m)     # never exceed the array
    return max(m, tile)


def _feature_mask_kernel(x_ref, token_ref, node_mask_ref, expand_ref, out_ref):
    """One (tile_rows, N*F) slab: expand the per-(row, node) {0,1} mask across
    the F feature lanes of each node with a bf16 matmul on the otherwise idle
    MXU, then blend the learnable token into the masked positions."""
    # (TR, N) @ (N, N*F) -> (TR, N*F); each output lane sees exactly one 1 in
    # its expand column, so the result is exactly {0, 1}.
    mask_wide = jnp.dot(node_mask_ref[...], expand_ref[...],
                        preferred_element_type=jnp.float32)
    x = x_ref[...]                             # (TR, N*F)
    token = token_ref[...].astype(x.dtype)     # (1,  N*F) node-tiled token
    out_ref[...] = jnp.where(mask_wide > 0.5, token, x)


def mask_one_feat(feat, mask_token, key, mask_ratio):
    """Pallas implementation of mask_nodes(..., mask_type='learnable')."""
    B, T, N, F = feat.shape
    rows = B * T
    lanes = N * F
    x2 = feat.reshape(rows, lanes)                               # lane-dense
    token_tiled = jnp.tile(mask_token.astype(feat.dtype).reshape(1, F), (1, N))

    # Bernoulli(mask_ratio) per (b, t, n).  Tiny (rows x N) draw done in XLA;
    # NOTE: uses jax.random, so it is not bit-compatible with torch.rand,
    # only the Bernoulli(mask_ratio) semantics are preserved.
    node_mask_bool = jax.random.uniform(key, (rows, N)) < mask_ratio
    node_mask = node_mask_bool.astype(jnp.bfloat16)              # {0,1} bf16

    # Loop-invariant node->lane expansion matrix, built once, resident in VMEM.
    # expand[n, c] = 1 iff lane c belongs to node n (c // F == n).
    expand = jnp.repeat(jnp.eye(N, dtype=jnp.bfloat16), F, axis=1)  # (N, N*F)

    tile_rows = _pick_tile_rows(rows, lanes, feat.dtype.itemsize)
    grid = (pl.cdiv(rows, tile_rows),)

    out2 = pl.pallas_call(
        _feature_mask_kernel,
        out_shape=jax.ShapeDtypeStruct((rows, lanes), feat.dtype),
        grid=grid,
        in_specs=[
            pl.BlockSpec((tile_rows, lanes), lambda i: (i, 0)),
            pl.BlockSpec((1, lanes), lambda i: (0, 0)),          # token (resident)
            pl.BlockSpec((tile_rows, N), lambda i: (i, 0)),      # node mask
            pl.BlockSpec((N, lanes), lambda i: (0, 0)),          # expand (resident)
        ],
        out_specs=pl.BlockSpec((tile_rows, lanes), lambda i: (i, 0)),
        compiler_params=pltpu.CompilerParams(
            dimension_semantics=("parallel",)),
    )(x2, token_tiled, node_mask, expand)

    masked_feat = out2.reshape(B, T, N, F)
    mask_indices = node_mask_bool.reshape(B, T, N)
    return masked_feat, mask_indices


@jax.jit
def _forward(mask_tokens, feats, mask_ratio, key):
    masked_feats, masks_indices = [], []
    for i, feat in enumerate(feats):
        k = jax.random.fold_in(key, i)
        mf, mi = mask_one_feat(feat, mask_tokens[i], k, mask_ratio)
        masked_feats.append(mf)
        masks_indices.append(mi)
    return tuple(masked_feats), tuple(masks_indices)


class FeatureMask:
    """JAX/Pallas port of the PyTorch FeatureMask module (learnable masking)."""

    def __init__(self, feats_dim, key):
        # nn.init.xavier_uniform_ on a (1, dim) tensor: U(-b, b),
        # b = sqrt(6 / (fan_in + fan_out)) = sqrt(6 / (1 + dim)).
        self.masks = []
        for i, dim in enumerate(feats_dim):
            k = jax.random.fold_in(key, i)
            bound = (6.0 / (1.0 + dim)) ** 0.5
            self.masks.append(
                jax.random.uniform(k, (1, dim), jnp.float32,
                                   minval=-bound, maxval=bound))

    def __call__(self, feats, mask_ratio=0.15, *, seed=0):
        key = jax.random.PRNGKey(seed)
        masked, indices = _forward(tuple(self.masks), tuple(feats),
                                   jnp.float32(mask_ratio), key)
        return list(masked), list(indices)


if __name__ == "__main__":
    key = jax.random.PRNGKey(0)
    k_param, k_data = jax.random.split(key, 2)

    # Small shapes consistent with (batch, in_steps, num_nodes, feature).
    B, T, N = 2, 8, 16
    feats_dim = [32, 16]

    module = FeatureMask(feats_dim, k_param)

    feats = []
    for i, dim in enumerate(feats_dim):
        kf = jax.random.fold_in(k_data, i)
        feats.append(jax.random.normal(kf, (B, T, N, dim), jnp.float32))

    masked_feats, masks_indices = module(feats, mask_ratio=0.15, seed=1234)
    masked_feats = [jax.block_until_ready(m) for m in masked_feats]
    masks_indices = [jax.block_until_ready(m) for m in masks_indices]

    # Correctness checks: select semantics (against the returned mask),
    # shapes/dtypes, and a loose Bernoulli-rate sanity check.
    ok = True
    total_masked, total_count = 0, 0
    for i, feat in enumerate(feats):
        mf, mi = masked_feats[i], masks_indices[i]
        ok &= mf.shape == feat.shape
        ok &= mi.shape == (B, T, N)
        ok &= mi.dtype == jnp.bool_
        ref = jnp.where(mi[..., None],
                        module.masks[i].reshape(1, 1, 1, -1), feat)
        ok &= bool(jnp.allclose(ref, mf, atol=1e-6, rtol=0.0))
        total_masked += int(mi.sum())
        total_count += mi.size
    frac = total_masked / total_count
    ok &= 0.01 < frac < 0.5   # ratio=0.15 over 512 draws; very wide band

    if ok:
        print("KERNEL_OK")
    else:
        raise SystemExit("mismatch vs reference (masked fraction=%f)" % frac)
</pallas_src>

<mosaic_0001>
module attributes {stable_mosaic.version = 11 : i64} {
  func.func @_feature_mask_kernel(%arg0: i32, %arg1: memref<16x256xf32, #tpu.memory_space<vmem>>, %arg2: memref<1x256xf32, #tpu.memory_space<vmem>>, %arg3: memref<16x16xbf16, #tpu.memory_space<vmem>>, %arg4: memref<16x256xbf16, #tpu.memory_space<vmem>>, %arg5: memref<16x256xf32, #tpu.memory_space<vmem>>) attributes {dimension_semantics = [#tpu.dimension_semantics<parallel>], iteration_bounds = array<i64: 1>, scalar_prefetch = 0 : i64, scratch_operands = 0 : i64, tpu.core_type = #tpu.core_type<tc>, window_params = [{transform_indices = @transform_0, window_bounds = array<i64: 16, 256>}, {pipeline_mode = #tpu.pipeline_mode<synchronous>, transform_indices = @transform_1, window_bounds = array<i64: 1, 256>}, {transform_indices = @transform_2, window_bounds = array<i64: 16, 16>}, {pipeline_mode = #tpu.pipeline_mode<synchronous>, transform_indices = @transform_3, window_bounds = array<i64: 16, 256>}, {transform_indices = @transform_4, window_bounds = array<i64: 16, 256>}]} {
    %c0 = arith.constant 0 : index
    %c0_0 = arith.constant 0 : index
    %0 = vector.load %arg3[%c0, %c0_0] : memref<16x16xbf16, #tpu.memory_space<vmem>>, vector<16x16xbf16>
    %c0_1 = arith.constant 0 : index
    %c0_2 = arith.constant 0 : index
    %1 = vector.load %arg4[%c0_1, %c0_2] : memref<16x256xbf16, #tpu.memory_space<vmem>>, vector<16x256xbf16>
    %cst = arith.constant dense<0.000000e+00> : vector<16x256xf32>
    %2 = tpu.matmul %0, %1, %cst {dimension_numbers = #tpu.dot_dimension_numbers<[1], [0], [0], [1], [0, 0, 1, 1], [], []>} : vector<16x16xbf16>, vector<16x256xbf16>, vector<16x256xf32> -> vector<16x256xf32>
    %c0_3 = arith.constant 0 : index
    %c0_4 = arith.constant 0 : index
    %3 = vector.load %arg1[%c0_3, %c0_4] : memref<16x256xf32, #tpu.memory_space<vmem>>, vector<16x256xf32>
    %c0_5 = arith.constant 0 : index
    %c0_6 = arith.constant 0 : index
    %4 = vector.load %arg2[%c0_5, %c0_6] : memref<1x256xf32, #tpu.memory_space<vmem>>, vector<1x256xf32>
    %cst_7 = arith.constant 5.000000e-01 : f32
    %5 = vector.broadcast %cst_7 : f32 to vector<16x256xf32>
    %6 = arith.cmpf ogt, %2, %5 : vector<16x256xf32>
    %7 = vector.shape_cast %4 : vector<1x256xf32> to vector<1x256xf32>
    %8 = vector.broadcast %7 : vector<1x256xf32> to vector<16x256xf32>
    %9 = arith.select %6, %8, %3 : vector<16x256xi1>, vector<16x256xf32>
    %c0_8 = arith.constant 0 : index
    %c0_9 = arith.constant 0 : index
    %10 = vector.load %arg5[%c0_8, %c0_9] : memref<16x256xf32, #tpu.memory_space<vmem>>, vector<16x256xf32>
    tpu.vector_store %arg5[%c0_8, %c0_9], %9 {strides = array<i32>} : memref<16x256xf32, #tpu.memory_space<vmem>>, vector<16x256xf32>,
    return
  }
  func.func @transform_0(%arg0: i32) -> (i32, i32) {
    %c0_i32 = arith.constant 0 : i32
    %c0_i32_0 = arith.constant 0 : i32
    return %arg0, %c0_i32 : i32, i32
  }
  func.func @transform_1(%arg0: i32) -> (i32, i32) {
    %c0_i32 = arith.constant 0 : i32
    %c0_i32_0 = arith.constant 0 : i32
    %c0_i32_1 = arith.constant 0 : i32
    return %c0_i32, %c0_i32_0 : i32, i32
  }
  func.func @transform_2(%arg0: i32) -> (i32, i32) {
    %c0_i32 = arith.constant 0 : i32
    %c0_i32_0 = arith.constant 0 : i32
    return %arg0, %c0_i32 : i32, i32
  }
  func.func @transform_3(%arg0: i32) -> (i32, i32) {
    %c0_i32 = arith.constant 0 : i32
    %c0_i32_0 = arith.constant 0 : i32
    %c0_i32_1 = arith.constant 0 : i32
    return %c0_i32, %c0_i32_0 : i32, i32
  }
  func.func @transform_4(%arg0: i32) -> (i32, i32) {
    %c0_i32 = arith.constant 0 : i32
    %c0_i32_0 = arith.constant 0 : i32
    return %arg0, %c0_i32 : i32, i32
  }
}

module attributes {stable_mosaic.version = 11 : i64} {
  func.func @_feature_mask_kernel(%arg0: i32, %arg1: memref<16x512xf32, #tpu.memory_space<vmem>>, %arg2: memref<1x512xf32, #tpu.memory_space<vmem>>, %arg3: memref<16x16xbf16, #tpu.memory_space<vmem>>, %arg4: memref<16x512xbf16, #tpu.memory_space<vmem>>, %arg5: memref<16x512xf32, #tpu.memory_space<vmem>>) attributes {dimension_semantics = [#tpu.dimension_semantics<parallel>], iteration_bounds = array<i64: 1>, scalar_prefetch = 0 : i64, scratch_operands = 0 : i64, tpu.core_type = #tpu.core_type<tc>, window_params = [{transform_indices = @transform_0, window_bounds = array<i64: 16, 512>}, {pipeline_mode = #tpu.pipeline_mode<synchronous>, transform_indices = @transform_1, window_bounds = array<i64: 1, 512>}, {transform_indices = @transform_2, window_bounds = array<i64: 16, 16>}, {pipeline_mode = #tpu.pipeline_mode<synchronous>, transform_indices = @transform_3, window_bounds = array<i64: 16, 512>}, {transform_indices = @transform_4, window_bounds = array<i64: 16, 512>}]} {
    %c0 = arith.constant 0 : index
    %c0_0 = arith.constant 0 : index
    %0 = vector.load %arg3[%c0, %c0_0] : memref<16x16xbf16, #tpu.memory_space<vmem>>, vector<16x16xbf16>
    %c0_1 = arith.constant 0 : index
    %c0_2 = arith.constant 0 : index
    %1 = vector.load %arg4[%c0_1, %c0_2] : memref<16x512xbf16, #tpu.memory_space<vmem>>, vector<16x512xbf16>
    %cst = arith.constant dense<0.000000e+00> : vector<16x512xf32>
    %2 = tpu.matmul %0, %1, %cst {dimension_numbers = #tpu.dot_dimension_numbers<[1], [0], [0], [1], [0, 0, 1, 1], [], []>} : vector<16x16xbf16>, vector<16x512xbf16>, vector<16x512xf32> -> vector<16x512xf32>
    %c0_3 = arith.constant 0 : index
    %c0_4 = arith.constant 0 : index
    %3 = vector.load %arg1[%c0_3, %c0_4] : memref<16x512xf32, #tpu.memory_space<vmem>>, vector<16x512xf32>
    %c0_5 = arith.constant 0 : index
    %c0_6 = arith.constant 0 : index
    %4 = vector.load %arg2[%c0_5, %c0_6] : memref<1x512xf32, #tpu.memory_space<vmem>>, vector<1x512xf32>
    %cst_7 = arith.constant 5.000000e-01 : f32
    %5 = vector.broadcast %cst_7 : f32 to vector<16x512xf32>
    %6 = arith.cmpf ogt, %2, %5 : vector<16x512xf32>
    %7 = vector.shape_cast %4 : vector<1x512xf32> to vector<1x512xf32>
    %8 = vector.broadcast %7 : vector<1x512xf32> to vector<16x512xf32>
    %9 = arith.select %6, %8, %3 : vector<16x512xi1>, vector<16x512xf32>
    %c0_8 = arith.constant 0 : index
    %c0_9 = arith.constant 0 : index
    %10 = vector.load %arg5[%c0_8, %c0_9] : memref<16x512xf32, #tpu.memory_space<vmem>>, vector<16x512xf32>
    tpu.vector_store %arg5[%c0_8, %c0_9], %9 {strides = array<i32>} : memref<16x512xf32, #tpu.memory_space<vmem>>, vector<16x512xf32>,
    return
  }
  func.func @transform_0(%arg0: i32) -> (i32, i32) {
    %c0_i32 = arith.constant 0 : i32
    %c0_i32_0 = arith.constant 0 : i32
    return %arg0, %c0_i32 : i32, i32
  }
  func.func @transform_1(%arg0: i32) -> (i32, i32) {
    %c0_i32 = arith.constant 0 : i32
    %c0_i32_0 = arith.constant 0 : i32
    %c0_i32_1 = arith.constant 0 : i32
    return %c0_i32, %c0_i32_0 : i32, i32
  }
  func.func @transform_2(%arg0: i32) -> (i32, i32) {
    %c0_i32 = arith.constant 0 : i32
    %c0_i32_0 = arith.constant 0 : i32
    return %arg0, %c0_i32 : i32, i32
  }
  func.func @transform_3(%arg0: i32) -> (i32, i32) {
    %c0_i32 = arith.constant 0 : i32
    %c0_i32_0 = arith.constant 0 : i32
    %c0_i32_1 = arith.constant 0 : i32
    return %c0_i32, %c0_i32_0 : i32, i32
  }
  func.func @transform_4(%arg0: i32) -> (i32, i32) {
    %c0_i32 = arith.constant 0 : i32
    %c0_i32_0 = arith.constant 0 : i32
    return %arg0, %c0_i32 : i32, i32
  }
}

</mosaic_0001>

<llo_original>
// kernel: _forward.2
$region0: #{_forward.2}
  #allocation0 [shape = 'u32[]', space=smem, size = 0x4, offset = 0x4, fixed_abs, tag = 'smem constant byte address 0x4 - core index']
  #allocation1 [shape = 'u32[72,128]{1,0:T(1,128)}', space=vmem, size = 0x9000, scoped, tag = 'internal scratch']
  %s0 = inlined_call_operand.vmem [shape: f32[16,512], index: 0, kind: input, shape index: {}]
  %s1 = inlined_call_operand.vmem [shape: f32[1,512], index: 1, kind: input, shape index: {}]
  %s2 = inlined_call_operand.vmem [shape: bf16[16,16], index: 2, kind: input, shape index: {}]
  %s3 = inlined_call_operand.vmem [shape: bf16[16,512], index: 3, kind: input, shape index: {}]
  %s4 = inlined_call_operand.vmem [shape: f32[16,512], index: 4, kind: output, shape index: {}]
  %s5 = sld [smem:[#allocation0]]
  $region26: #{_forward.2} parent=0
    _
  %s7 = ssub.s32 1, %s5
  %s8 = scalar_select 0, %s7, %s5
  // Predicated region
  $region2: #{_forward.2} parent=0 // pred_check
    _
  $region3: #{_forward.2} parent=0 // pred_check_branch
    %10 = sbr.rel (0) target = $region5
  $region4: #{_forward.2} parent=0 // pred_region
    _
  $region5: #{_forward.2} parent=0 // pred_fallthru
    _
  // Predicated region
  $region6: #{_forward.2} parent=0 // pred_check
    _
  $region7: #{_forward.2} parent=0 // pred_check_branch
    %12 = sbr.rel (0) target = $region9
  $region8: #{_forward.2} parent=0 // pred_region
    _
  $region9: #{_forward.2} parent=0 // pred_fallthru
    _
  // Predicated region
  $region10: #{_forward.2} parent=0 // pred_check
    _
  $region11: #{_forward.2} parent=0 // pred_check_branch
    %14 = sbr.rel (0) target = $region13
  $region12: #{_forward.2} parent=0 // pred_region
    _
  $region13: #{_forward.2} parent=0 // pred_fallthru
    _
  // Predicated region
  $region14: #{_forward.2} parent=0 // pred_check
    _
  $region15: #{_forward.2} parent=0 // pred_check_branch
    %16 = sbr.rel (0) target = $region17
  $region16: #{_forward.2} parent=0 // pred_region
    _
  $region17: #{_forward.2} parent=0 // pred_fallthru
    _
  %v18 = vld [vmem:[%s2] sm:$0xf]
  %v19 = vld [vmem:[%s2 + $0x4] sm:$0xf]
  %v20 = vld [vmem:[%s3] sm:$0xff]
  %v21 = vld [vmem:[%s3 + $0x8] sm:$0xff]
  %v22 = vld [vmem:[%s3 + $0x10] sm:$0xff]
  %v23 = vld [vmem:[%s3 + $0x18] sm:$0xff]
  %v26 = vunpack.c.l.b16 %v18
  %v27 = vunpack.c.l.b16 %v19
  %v28 = vpack.c.b16 %v27, %v26
  %v33 = vunpack.c.l.b16 %v20
  %v34 = vunpack.c.h.b16 %v20
  %v35 = vunpack.c.l.b16 %v21
  %v36 = vunpack.c.h.b16 %v21
  %v37 = vunpack.c.l.b16 %v22
  %v38 = vunpack.c.h.b16 %v22
  %v39 = vunpack.c.l.b16 %v23
  %v40 = vunpack.c.h.b16 %v23
  %v41 = vpack.c.b16 %v37, %v33
  %v42 = vpack.c.b16 %v38, %v34
  %v43 = vpack.c.b16 %v39, %v35
  %v44 = vpack.c.b16 %v40, %v36
  %vm49 = vcmask 130048
  %v51 = vsel %vm49, %v28, 0
  %53 = vmatpush.bf16.msra.mxu0 0
  %54 = vmatpush.bf16.msra.mxu0 0
  %55 = vmatpush.bf16.msra.mxu0 0
  %56 = vmatpush.bf16.msra.mxu0 0
  %57 = vmatpush.bf16.msra.mxu0 0
  %58 = vmatpush.bf16.msra.mxu0 0
  %59 = vmatpush.bf16.msra.mxu0 0
  %60 = vmatpush.bf16.msra.mxu0 %v41
  %61 = vmatmul.bf16.gmra.mxu0 %v51
  %v62 = vpop.f32.mrf.mxu0
  %v63 = vadd.f32 0.0, %v62
  %v64 = vpop.f32.mrf.mxu0
  %v65 = vadd.f32 0.0, %v64
  %66 = vdwg.mxu0
  %67 = vmatpush.bf16.msra.mxu0 0
  %68 = vmatpush.bf16.msra.mxu0 0
  %69 = vmatpush.bf16.msra.mxu0 0
  %70 = vmatpush.bf16.msra.mxu0 0
  %71 = vmatpush.bf16.msra.mxu0 0
  %72 = vmatpush.bf16.msra.mxu0 0
  %73 = vmatpush.bf16.msra.mxu0 0
  %74 = vmatpush.bf16.msra.mxu0 %v42
  %75 = vmatmul.bf16.gmra.mxu0 %v51
  %v76 = vpop.f32.mrf.mxu0
  %v77 = vadd.f32 0.0, %v76
  %v78 = vpop.f32.mrf.mxu0
  %v79 = vadd.f32 0.0, %v78
  %80 = vdwg.mxu0
  %81 = vmatpush.bf16.msra.mxu0 0
  %82 = vmatpush.bf16.msra.mxu0 0
  %83 = vmatpush.bf16.msra.mxu0 0
  %84 = vmatpush.bf16.msra.mxu0 0
  %85 = vmatpush.bf16.msra.mxu0 0
  %86 = vmatpush.bf16.msra.mxu0 0
  %87 = vmatpush.bf16.msra.mxu0 0
  %88 = vmatpush.bf16.msra.mxu0 %v43
  %89 = vmatmul.bf16.gmra.mxu0 %v51
  %v90 = vpop.f32.mrf.mxu0
  %v91 = vadd.f32 0.0, %v90
  %v92 = vpop.f32.mrf.mxu0
  %v93 = vadd.f32 0.0, %v92
  %94 = vdwg.mxu0
  %95 = vmatpush.bf16.msra.mxu0 0
  %96 = vmatpush.bf16.msra.mxu0 0
  %97 = vmatpush.bf16.msra.mxu0 0
  %98 = vmatpush.bf16.msra.mxu0 0
  %99 = vmatpush.bf16.msra.mxu0 0
  %100 = vmatpush.bf16.msra.mxu0 0
  %101 = vmatpush.bf16.msra.mxu0 0
  %102 = vmatpush.bf16.msra.mxu0 %v44
  %103 = vmatmul.bf16.gmra.mxu0 %v51
  %v104 = vpop.f32.mrf.mxu0
  %v105 = vadd.f32 0.0, %v104
  %v106 = vpop.f32.mrf.mxu0
  %v107 = vadd.f32 0.0, %v106
  %108 = vdwg.mxu0
  %v109 = vld [vmem:[%s0] sm:$0xff]
  %v110 = vld [vmem:[%s0 + $0x8] sm:$0xff]
  %v111 = vld [vmem:[%s0 + $0x10] sm:$0xff]
  %v112 = vld [vmem:[%s0 + $0x18] sm:$0xff]
  %v113 = vld [vmem:[%s0 + $0x20] sm:$0xff]
  %v114 = vld [vmem:[%s0 + $0x28] sm:$0xff]
  %v115 = vld [vmem:[%s0 + $0x30] sm:$0xff]
  %v116 = vld [vmem:[%s0 + $0x38] sm:$0xff]
  %v117 = vld [vmem:[%s1] sm:$0xf]
  %vm118 = vcmp.gt.f32.partialorder %v63, 0.5
  %vm119 = vcmp.gt.f32.partialorder %v77, 0.5
  %vm120 = vcmp.gt.f32.partialorder %v91, 0.5
  %vm121 = vcmp.gt.f32.partialorder %v105, 0.5
  %vm122 = vcmp.gt.f32.partialorder %v65, 0.5
  %vm123 = vcmp.gt.f32.partialorder %v79, 0.5
  %vm124 = vcmp.gt.f32.partialorder %v93, 0.5
  %vm125 = vcmp.gt.f32.partialorder %v107, 0.5
  %v127 = vperm.slane %v117, 0
  %v128 = vperm.slane %v117, 1
  %v129 = vperm.slane %v117, 2
  %v130 = vperm.slane %v117, 3
  %v135 = vsel %vm118, %v127, %v109
  %v136 = vsel %vm119, %v128, %v110
  %v137 = vsel %vm120, %v129, %v111
  %v138 = vsel %vm121, %v130, %v112
  %v139 = vsel %vm122, %v127, %v113
  %v140 = vsel %vm123, %v128, %v114
  %v141 = vsel %vm124, %v129, %v115
  %v142 = vsel %vm125, %v130, %v116
  %143 = vst [vmem:[%s4] sm:$0xff] %v135
  %144 = vst [vmem:[%s4 + $0x8] sm:$0xff] %v136
  %145 = vst [vmem:[%s4 + $0x10] sm:$0xff] %v137
  %146 = vst [vmem:[%s4 + $0x18] sm:$0xff] %v138
  %147 = vst [vmem:[%s4 + $0x20] sm:$0xff] %v139
  %148 = vst [vmem:[%s4 + $0x28] sm:$0xff] %v140
  %149 = vst [vmem:[%s4 + $0x30] sm:$0xff] %v141
  %150 = vst [vmem:[%s4 + $0x38] sm:$0xff] %v142
  // Predicated region
  $region18: #{_forward.2} parent=0 // pred_check
    _
  $region19: #{_forward.2} parent=0 // pred_check_branch
    %152 = sbr.rel (0) target = $region21
  $region20: #{_forward.2} parent=0 // pred_region
    _
  $region21: #{_forward.2} parent=0 // pred_fallthru
    _
  // Predicated region
  $region22: #{_forward.2} parent=0 // pred_check
    _
  $region23: #{_forward.2} parent=0 // pred_check_branch
    %154 = sbr.rel (0) target = $region25
  $region24: #{_forward.2} parent=0 // pred_region
    _
  $region25: #{_forward.2} parent=0 // pred_fallthru
    _

// kernel: _forward.3
$region0: #{_forward.3}
  #allocation0 [shape = 'u32[]', space=smem, size = 0x4, offset = 0x4, fixed_abs, tag = 'smem constant byte address 0x4 - core index']
  #allocation1 [shape = 'u32[72,128]{1,0:T(1,128)}', space=vmem, size = 0x9000, scoped, tag = 'internal scratch']
  %s0 = inlined_call_operand.vmem [shape: f32[16,256], index: 0, kind: input, shape index: {}]
  %s1 = inlined_call_operand.vmem [shape: f32[1,256], index: 1, kind: input, shape index: {}]
  %s2 = inlined_call_operand.vmem [shape: bf16[16,16], index: 2, kind: input, shape index: {}]
  %s3 = inlined_call_operand.vmem [shape: bf16[16,256], index: 3, kind: input, shape index: {}]
  %s4 = inlined_call_operand.vmem [shape: f32[16,256], index: 4, kind: output, shape index: {}]
  %s5 = sld [smem:[#allocation0]]
  $region26: #{_forward.3} parent=0
    _
  %s7 = ssub.s32 1, %s5
  %s8 = scalar_select 0, %s7, %s5
  // Predicated region
  $region2: #{_forward.3} parent=0 // pred_check
    _
  $region3: #{_forward.3} parent=0 // pred_check_branch
    %10 = sbr.rel (0) target = $region5
  $region4: #{_forward.3} parent=0 // pred_region
    _
  $region5: #{_forward.3} parent=0 // pred_fallthru
    _
  // Predicated region
  $region6: #{_forward.3} parent=0 // pred_check
    _
  $region7: #{_forward.3} parent=0 // pred_check_branch
    %12 = sbr.rel (0) target = $region9
  $region8: #{_forward.3} parent=0 // pred_region
    _
  $region9: #{_forward.3} parent=0 // pred_fallthru
    _
  // Predicated region
  $region10: #{_forward.3} parent=0 // pred_check
    _
  $region11: #{_forward.3} parent=0 // pred_check_branch
    %14 = sbr.rel (0) target = $region13
  $region12: #{_forward.3} parent=0 // pred_region
    _
  $region13: #{_forward.3} parent=0 // pred_fallthru
    _
  // Predicated region
  $region14: #{_forward.3} parent=0 // pred_check
    _
  $region15: #{_forward.3} parent=0 // pred_check_branch
    %16 = sbr.rel (0) target = $region17
  $region16: #{_forward.3} parent=0 // pred_region
    _
  $region17: #{_forward.3} parent=0 // pred_fallthru
    _
  %v18 = vld [vmem:[%s2] sm:$0xf]
  %v19 = vld [vmem:[%s2 + $0x4] sm:$0xf]
  %v20 = vld [vmem:[%s3] sm:$0xff]
  %v21 = vld [vmem:[%s3 + $0x8] sm:$0xff]
  %v24 = vunpack.c.l.b16 %v18
  %v25 = vunpack.c.l.b16 %v19
  %v26 = vpack.c.b16 %v25, %v24
  %v29 = vunpack.c.l.b16 %v20
  %v30 = vunpack.c.h.b16 %v20
  %v31 = vunpack.c.l.b16 %v21
  %v32 = vunpack.c.h.b16 %v21
  %v33 = vpack.c.b16 %v31, %v29
  %v34 = vpack.c.b16 %v32, %v30
  %vm37 = vcmask 130048
  %v39 = vsel %vm37, %v26, 0
  %41 = vmatpush.bf16.msra.mxu0 0
  %42 = vmatpush.bf16.msra.mxu0 0
  %43 = vmatpush.bf16.msra.mxu0 0
  %44 = vmatpush.bf16.msra.mxu0 0
  %45 = vmatpush.bf16.msra.mxu0 0
  %46 = vmatpush.bf16.msra.mxu0 0
  %47 = vmatpush.bf16.msra.mxu0 0
  %48 = vmatpush.bf16.msra.mxu0 %v33
  %49 = vmatmul.bf16.gmra.mxu0 %v39
  %v50 = vpop.f32.mrf.mxu0
  %v51 = vadd.f32 0.0, %v50
  %v52 = vpop.f32.mrf.mxu0
  %v53 = vadd.f32 0.0, %v52
  %54 = vdwg.mxu0
  %55 = vmatpush.bf16.msra.mxu0 0
  %56 = vmatpush.bf16.msra.mxu0 0
  %57 = vmatpush.bf16.msra.mxu0 0
  %58 = vmatpush.bf16.msra.mxu0 0
  %59 = vmatpush.bf16.msra.mxu0 0
  %60 = vmatpush.bf16.msra.mxu0 0
  %61 = vmatpush.bf16.msra.mxu0 0
  %62 = vmatpush.bf16.msra.mxu0 %v34
  %63 = vmatmul.bf16.gmra.mxu0 %v39
  %v64 = vpop.f32.mrf.mxu0
  %v65 = vadd.f32 0.0, %v64
  %v66 = vpop.f32.mrf.mxu0
  %v67 = vadd.f32 0.0, %v66
  %68 = vdwg.mxu0
  %v69 = vld [vmem:[%s0] sm:$0xff]
  %v70 = vld [vmem:[%s0 + $0x8] sm:$0xff]
  %v71 = vld [vmem:[%s0 + $0x10] sm:$0xff]
  %v72 = vld [vmem:[%s0 + $0x18] sm:$0xff]
  %v73 = vld [vmem:[%s1] sm:$0x3]
  %vm74 = vcmp.gt.f32.partialorder %v51, 0.5
  %vm75 = vcmp.gt.f32.partialorder %v65, 0.5
  %vm76 = vcmp.gt.f32.partialorder %v53, 0.5
  %vm77 = vcmp.gt.f32.partialorder %v67, 0.5
  %v79 = vperm.slane %v73, 0
  %v80 = vperm.slane %v73, 1
  %v83 = vsel %vm74, %v79, %v69
  %v84 = vsel %vm75, %v80, %v70
  %v85 = vsel %vm76, %v79, %v71
  %v86 = vsel %vm77, %v80, %v72
  %87 = vst [vmem:[%s4] sm:$0xff] %v83
  %88 = vst [vmem:[%s4 + $0x8] sm:$0xff] %v84
  %89 = vst [vmem:[%s4 + $0x10] sm:$0xff] %v85
  %90 = vst [vmem:[%s4 + $0x18] sm:$0xff] %v86
  // Predicated region
  $region18: #{_forward.3} parent=0 // pred_check
    _
  $region19: #{_forward.3} parent=0 // pred_check_branch
    %92 = sbr.rel (0) target = $region21
  $region20: #{_forward.3} parent=0 // pred_region
    _
  $region21: #{_forward.3} parent=0 // pred_fallthru
    _
  // Predicated region
  $region22: #{_forward.3} parent=0 // pred_check
    _
  $region23: #{_forward.3} parent=0 // pred_check_branch
    %94 = sbr.rel (0) target = $region25
  $region24: #{_forward.3} parent=0 // pred_region
    _
  $region25: #{_forward.3} parent=0 // pred_fallthru
    _

</llo_original>
